<compile_context>
chip_gen: v7x
topology: tpu7x:2x2x1
jax: 0.10.0
libtpu: 0.0.40
codegen_flags: <defaults>
</compile_context>

<pallas_src>
import jax
import jax.numpy as jnp
from jax.experimental import pallas as pl
from jax.experimental.pallas import tpu as pltpu


# ----------------------------------------------------------------------------
# Single fused kernel: conv matmul + pool + heads + classifier + losses.
# ----------------------------------------------------------------------------
def _make_fused_kernel(kernel_sizes, kernel_num, seq_len, embed_dim, label_idx, batch):
    K = kernel_num
    E = embed_dim
    SP = seq_len + 4                        # padded sequence length (padding=(2, 0))

    col_off = []                            # column offset of each filter inside fused weight
    off = 0
    for f in kernel_sizes:
        col_off.append(off)
        off += f * K

    def kernel(x_ref, lab_ref, wconv_ref, bconv_ref, wh_ref, bh_ref,
               wcm_ref, wcl_ref, bc_ref, logits_ref, loss_ref):
        # --- conv stage: ONE matmul for all batch rows, filters and shifts ---
        y = jnp.dot(x_ref[...], wconv_ref[...],
                    preferred_element_type=jnp.float32)            # (B*SP, sum(f)*K)

        pooled_rows = []
        for b in range(batch):                                     # static unroll
            r0 = b * SP
            feats = []
            for fi, f in enumerate(kernel_sizes):
                L = seq_len + 5 - f                                # conv output length
                c0 = col_off[fi]
                acc = y[r0:r0 + L, c0:c0 + K]
                for i in range(1, f):                              # shifted accumulation
                    acc = acc + y[r0 + i:r0 + i + L,
                                  c0 + i * K:c0 + (i + 1) * K]
                feats.append(jnp.max(acc, axis=0, keepdims=True))  # (1, K) max over time
            pooled_rows.append(jnp.concatenate(feats, axis=-1))    # (1, nf*K)
        pooled = jnp.concatenate(pooled_rows, axis=0)              # (B, nf*K)

        # bias + ReLU after the max-pool (ReLU monotone, bias constant over pooled axis).
        # Dropout: identity in eval mode.
        x_feat = jnp.maximum(pooled + bconv_ref[...], 0.0)

        # --- mu / logvar heads fused in one matmul (eval-mode BN folded on host) ---
        heads = (jnp.dot(x_feat, wh_ref[...], preferred_element_type=jnp.float32)
                 + bh_ref[...])                                    # (B, 2E)
        mu = heads[:, :E]
        lv = heads[:, E:]

        # --- labels: classifier part and BCE target from one lane-dense block ---
        lab = lab_ref[...]                                         # (B, NUM_TOTAL_LABELS)
        lab_head = lab[:, :label_idx]                              # (B, label_idx)
        y_true = lab[:, label_idx:label_idx + 1]                   # (B, 1)

        # --- classifier: cat(mu, lab_head) @ Wc == mu @ Wc_mu + lab_head @ Wc_lab ---
        logits = (jnp.dot(mu, wcm_ref[...], preferred_element_type=jnp.float32)
                  + jnp.dot(lab_head, wcl_ref[...], preferred_element_type=jnp.float32)
                  + bc_ref[...])                                   # (B, num_labels)

        # --- KL: ((var + mu^2 - log var - 1) * 0.5).sum(-1).mean();  log var == lv ---
        var = jnp.exp(lv)
        kl_per = jnp.sum((var + mu * mu - lv - 1.0) * 0.5, axis=-1, keepdims=True)
        loss_kl = jnp.mean(kl_per, axis=0, keepdims=True)          # (1, 1)

        # --- harmonic mean of std over features, mean over batch; 1/std = exp(-0.5*lv) ---
        inv_std = jnp.exp(-0.5 * lv)
        hm = jnp.float32(E) / jnp.sum(inv_std, axis=-1, keepdims=True)
        loss_std = jnp.mean(hm, axis=0, keepdims=True)             # (1, 1)

        # --- BCEWithLogitsLoss (mean reduction), numerically stable ---
        z = logits
        bce = jnp.maximum(z, 0.0) - z * y_true + jnp.log1p(jnp.exp(-jnp.abs(z)))
        loss_bce = jnp.mean(bce, axis=(0, 1), keepdims=True)       # (1, 1)

        logits_ref[...] = logits
        loss_ref[...] = 1e-4 * loss_kl + 0.1 * loss_std + loss_bce

    return kernel


def _full_block(shape):
    zeros = (0,) * len(shape)
    return pl.BlockSpec(shape, lambda i, _z=zeros: _z)


# ----------------------------------------------------------------------------
# Parameter construction (matches PyTorch module shapes).
# ----------------------------------------------------------------------------
def init_params(key, embed_dim, kernel_num, kernel_sizes, input_dim, num_labels):
    F_in = kernel_num * len(kernel_sizes)
    keys = jax.random.split(key, 2 * len(kernel_sizes) + 6)
    p = {}
    p["conv_w"], p["conv_b"] = [], []
    for i, f in enumerate(kernel_sizes):
        p["conv_w"].append(
            0.1 * jax.random.normal(keys[2 * i], (kernel_num, 1, f, embed_dim), jnp.float32))
        p["conv_b"].append(
            0.1 * jax.random.normal(keys[2 * i + 1], (kernel_num,), jnp.float32))
    base = 2 * len(kernel_sizes)
    p["mu_w"] = 0.1 * jax.random.normal(keys[base + 0], (embed_dim, F_in), jnp.float32)
    p["mu_b"] = 0.1 * jax.random.normal(keys[base + 1], (embed_dim,), jnp.float32)
    p["lv_w"] = 0.1 * jax.random.normal(keys[base + 2], (embed_dim, F_in), jnp.float32)
    p["lv_b"] = 0.1 * jax.random.normal(keys[base + 3], (embed_dim,), jnp.float32)
    p["bn_gamma"] = jnp.ones((embed_dim,), jnp.float32)
    p["bn_beta"] = jnp.zeros((embed_dim,), jnp.float32)
    p["bn_mean"] = jnp.zeros((embed_dim,), jnp.float32)
    p["bn_var"] = jnp.ones((embed_dim,), jnp.float32)
    p["bn_eps"] = 1e-5
    p["cls_w"] = 0.1 * jax.random.normal(keys[base + 4], (num_labels, input_dim), jnp.float32)
    p["cls_b"] = 0.1 * jax.random.normal(keys[base + 5], (num_labels,), jnp.float32)
    return p


def _fold_bn(lin_w, lin_b, gamma, beta, rmean, rvar, eps):
    # y = BN(x @ W.T + b)  ->  x @ W_eff + b_eff   (eval-mode BN, running stats)
    scale = gamma / jnp.sqrt(rvar + eps)                 # (out,)
    w_eff = lin_w.T * scale[None, :]                     # (in, out)
    b_eff = (lin_b - rmean) * scale + beta               # (out,)
    return w_eff, b_eff.reshape(1, -1)


# ----------------------------------------------------------------------------
# Full forward (eval mode, istrain=False): returns (loss, logits).
# ----------------------------------------------------------------------------
def forward(params, embedded, labels, label_idx, kernel_sizes, kernel_num):
    B, S, E = embedded.shape
    x_pad = jnp.pad(embedded, ((0, 0), (2, 2), (0, 0)))             # pad seq by (2, 2)
    x_flat = x_pad.reshape(B * (S + 4), E)                          # flatten for one conv matmul

    # Fuse all conv kernels into one (E, sum(f)*K) weight; bias laid out as (1, nf*K).
    conv_blocks = []
    for f, w in zip(kernel_sizes, params["conv_w"]):
        # w: (K, 1, f, E); the shift-i matmul matrix is w[:, 0, i, :].T -> (E, K)
        conv_blocks.append(jnp.concatenate(
            [jnp.transpose(w[:, 0, i, :]) for i in range(f)], axis=1))
    w_conv = jnp.concatenate(conv_blocks, axis=1)                    # (E, sum(f)*K)
    b_conv = jnp.concatenate(
        [b.reshape(1, kernel_num) for b in params["conv_b"]], axis=1)  # (1, nf*K)

    # Fold eval-mode BatchNorm into the mu / logvar Linears and fuse both heads.
    wmu, bmu = _fold_bn(params["mu_w"], params["mu_b"], params["bn_gamma"],
                        params["bn_beta"], params["bn_mean"], params["bn_var"],
                        params["bn_eps"])
    wlv, blv = _fold_bn(params["lv_w"], params["lv_b"], params["bn_gamma"],
                        params["bn_beta"], params["bn_mean"], params["bn_var"],
                        params["bn_eps"])
    w_heads = jnp.concatenate([wmu, wlv], axis=1)                    # (nf*K, 2E)
    b_heads = jnp.concatenate([bmu, blv], axis=1)                    # (1, 2E)

    # Classifier weight split so no in-kernel feature concat is needed:
    # cat(mu, labels[:, :label_idx]) @ Wc == mu @ Wc[:E] + labels[:, :label_idx] @ Wc[E:]
    wc = jnp.transpose(params["cls_w"])                              # (input_dim, num_labels)
    wc_mu = wc[:E, :]
    wc_lab = wc[E:E + label_idx, :]
    bc = params["cls_b"].reshape(1, -1)
    NL = wc.shape[1]

    labels_f = labels.astype(jnp.float32)

    kernel = _make_fused_kernel(tuple(kernel_sizes), kernel_num, S, E, label_idx, B)

    inputs = [x_flat, labels_f, w_conv, b_conv, w_heads, b_heads, wc_mu, wc_lab, bc]
    logits, loss = pl.pallas_call(
        kernel,
        out_shape=(
            jax.ShapeDtypeStruct((B, NL), jnp.float32),
            jax.ShapeDtypeStruct((1, 1), jnp.float32),
        ),
        grid=(1,),
        in_specs=[_full_block(a.shape) for a in inputs],
        out_specs=(
            _full_block((B, NL)),
            _full_block((1, 1)),
        ),
        compiler_params=pltpu.CompilerParams(dimension_semantics=("arbitrary",)),
    )(*inputs)
    return loss[0, 0], logits


if __name__ == "__main__":
    # Small, module-consistent shapes.
    B, SEQ, EMBED = 2, 8, 32
    KERNEL_NUM = 4
    KERNEL_SIZES = (3, 4, 5)
    LABEL_IDX = 3
    NUM_TOTAL_LABELS = 6
    NUM_LABELS = 1
    INPUT_DIM = EMBED + LABEL_IDX   # classifier input = cat(mu, labels[:, :label_idx])

    key = jax.random.PRNGKey(0)
    k_param, k_emb, k_lab = jax.random.split(key, 3)

    params = init_params(k_param, EMBED, KERNEL_NUM, KERNEL_SIZES, INPUT_DIM, NUM_LABELS)
    embedded = jax.random.normal(k_emb, (B, SEQ, EMBED), jnp.float32)
    labels = jax.random.bernoulli(k_lab, 0.5, (B, NUM_TOTAL_LABELS)).astype(jnp.float32)

    loss, logits = forward(params, embedded, labels, LABEL_IDX, KERNEL_SIZES, KERNEL_NUM)
    jax.block_until_ready((loss, logits))
    assert logits.shape == (B, NUM_LABELS)
    assert loss.shape == ()
    print("KERNEL_OK")
</pallas_src>

<mosaic_0001>
module attributes {stable_mosaic.version = 11 : i64} {
  func.func @kernel(%arg0: i32, %arg1: memref<24x32xf32, #tpu.memory_space<vmem>>, %arg2: memref<2x6xf32, #tpu.memory_space<vmem>>, %arg3: memref<32x48xf32, #tpu.memory_space<vmem>>, %arg4: memref<1x12xf32, #tpu.memory_space<vmem>>, %arg5: memref<12x64xf32, #tpu.memory_space<vmem>>, %arg6: memref<1x64xf32, #tpu.memory_space<vmem>>, %arg7: memref<32x1xf32, #tpu.memory_space<vmem>>, %arg8: memref<3x1xf32, #tpu.memory_space<vmem>>, %arg9: memref<1x1xf32, #tpu.memory_space<vmem>>, %arg10: memref<2x1xf32, #tpu.memory_space<vmem>>, %arg11: memref<1x1xf32, #tpu.memory_space<vmem>>) attributes {dimension_semantics = [#tpu.dimension_semantics<arbitrary>], iteration_bounds = array<i64: 1>, scalar_prefetch = 0 : i64, scratch_operands = 0 : i64, tpu.core_type = #tpu.core_type<tc>, window_params = [{pipeline_mode = #tpu.pipeline_mode<synchronous>, transform_indices = @transform_0, window_bounds = array<i64: 24, 32>}, {pipeline_mode = #tpu.pipeline_mode<synchronous>, transform_indices = @transform_1, window_bounds = array<i64: 2, 6>}, {pipeline_mode = #tpu.pipeline_mode<synchronous>, transform_indices = @transform_2, window_bounds = array<i64: 32, 48>}, {pipeline_mode = #tpu.pipeline_mode<synchronous>, transform_indices = @transform_3, window_bounds = array<i64: 1, 12>}, {pipeline_mode = #tpu.pipeline_mode<synchronous>, transform_indices = @transform_4, window_bounds = array<i64: 12, 64>}, {pipeline_mode = #tpu.pipeline_mode<synchronous>, transform_indices = @transform_5, window_bounds = array<i64: 1, 64>}, {pipeline_mode = #tpu.pipeline_mode<synchronous>, transform_indices = @transform_6, window_bounds = array<i64: 32, 1>}, {pipeline_mode = #tpu.pipeline_mode<synchronous>, transform_indices = @transform_7, window_bounds = array<i64: 3, 1>}, {pipeline_mode = #tpu.pipeline_mode<synchronous>, transform_indices = @transform_8, window_bounds = array<i64: 1, 1>}, {pipeline_mode = #tpu.pipeline_mode<synchronous>, transform_indices = @transform_9, window_bounds = array<i64: 2, 1>}, {pipeline_mode = #tpu.pipeline_mode<synchronous>, transform_indices = @transform_10, window_bounds = array<i64: 1, 1>}]} {
    %c0 = arith.constant 0 : index
    %c0_0 = arith.constant 0 : index
    %0 = vector.load %arg1[%c0, %c0_0] : memref<24x32xf32, #tpu.memory_space<vmem>>, vector<24x32xf32>
    %c0_1 = arith.constant 0 : index
    %c0_2 = arith.constant 0 : index
    %1 = vector.load %arg3[%c0_1, %c0_2] : memref<32x48xf32, #tpu.memory_space<vmem>>, vector<32x48xf32>
    %cst = arith.constant dense<0.000000e+00> : vector<24x48xf32>
    %2 = tpu.matmul %0, %1, %cst {dimension_numbers = #tpu.dot_dimension_numbers<[1], [0], [0], [1], [0, 0, 1, 1], [], []>} : vector<24x32xf32>, vector<32x48xf32>, vector<24x48xf32> -> vector<24x48xf32>
    %3 = vector.extract_strided_slice %2 {offsets = [0, 0], sizes = [10, 4], strides = [1, 1]} : vector<24x48xf32> to vector<10x4xf32>
    %4 = vector.extract_strided_slice %2 {offsets = [1, 4], sizes = [10, 4], strides = [1, 1]} : vector<24x48xf32> to vector<10x4xf32>
    %5 = arith.addf %3, %4 : vector<10x4xf32>
    %6 = vector.extract_strided_slice %2 {offsets = [2, 8], sizes = [10, 4], strides = [1, 1]} : vector<24x48xf32> to vector<10x4xf32>
    %7 = arith.addf %5, %6 : vector<10x4xf32>
    %cst_3 = arith.constant dense<0xFF800000> : vector<4xf32>
    %8 = vector.multi_reduction <maximumf>, %7, %cst_3 [0] : vector<10x4xf32> to vector<4xf32>
    %9 = vector.shape_cast %8 : vector<4xf32> to vector<1x4xf32>
    %10 = vector.extract_strided_slice %2 {offsets = [0, 12], sizes = [9, 4], strides = [1, 1]} : vector<24x48xf32> to vector<9x4xf32>
    %11 = vector.extract_strided_slice %2 {offsets = [1, 16], sizes = [9, 4], strides = [1, 1]} : vector<24x48xf32> to vector<9x4xf32>
    %12 = arith.addf %10, %11 : vector<9x4xf32>
    %13 = vector.extract_strided_slice %2 {offsets = [2, 20], sizes = [9, 4], strides = [1, 1]} : vector<24x48xf32> to vector<9x4xf32>
    %14 = arith.addf %12, %13 : vector<9x4xf32>
    %15 = vector.extract_strided_slice %2 {offsets = [3, 24], sizes = [9, 4], strides = [1, 1]} : vector<24x48xf32> to vector<9x4xf32>
    %16 = arith.addf %14, %15 : vector<9x4xf32>
    %cst_4 = arith.constant dense<0xFF800000> : vector<4xf32>
    %17 = vector.multi_reduction <maximumf>, %16, %cst_4 [0] : vector<9x4xf32> to vector<4xf32>
    %18 = vector.shape_cast %17 : vector<4xf32> to vector<1x4xf32>
    %19 = vector.extract_strided_slice %2 {offsets = [0, 28], sizes = [8, 4], strides = [1, 1]} : vector<24x48xf32> to vector<8x4xf32>
    %20 = vector.extract_strided_slice %2 {offsets = [1, 32], sizes = [8, 4], strides = [1, 1]} : vector<24x48xf32> to vector<8x4xf32>
    %21 = arith.addf %19, %20 : vector<8x4xf32>
    %22 = vector.extract_strided_slice %2 {offsets = [2, 36], sizes = [8, 4], strides = [1, 1]} : vector<24x48xf32> to vector<8x4xf32>
    %23 = arith.addf %21, %22 : vector<8x4xf32>
    %24 = vector.extract_strided_slice %2 {offsets = [3, 40], sizes = [8, 4], strides = [1, 1]} : vector<24x48xf32> to vector<8x4xf32>
    %25 = arith.addf %23, %24 : vector<8x4xf32>
    %26 = vector.extract_strided_slice %2 {offsets = [4, 44], sizes = [8, 4], strides = [1, 1]} : vector<24x48xf32> to vector<8x4xf32>
    %27 = arith.addf %25, %26 : vector<8x4xf32>
    %cst_5 = arith.constant dense<0xFF800000> : vector<4xf32>
    %28 = vector.multi_reduction <maximumf>, %27, %cst_5 [0] : vector<8x4xf32> to vector<4xf32>
    %29 = vector.shape_cast %28 : vector<4xf32> to vector<1x4xf32>
    %30 = tpu.concatenate %9, %18, %29 in 1 : vector<1x4xf32>, vector<1x4xf32>, vector<1x4xf32> -> vector<1x12xf32>
    %31 = vector.extract_strided_slice %2 {offsets = [12, 0], sizes = [10, 4], strides = [1, 1]} : vector<24x48xf32> to vector<10x4xf32>
    %32 = vector.extract_strided_slice %2 {offsets = [13, 4], sizes = [10, 4], strides = [1, 1]} : vector<24x48xf32> to vector<10x4xf32>
    %33 = arith.addf %31, %32 : vector<10x4xf32>
    %34 = vector.extract_strided_slice %2 {offsets = [14, 8], sizes = [10, 4], strides = [1, 1]} : vector<24x48xf32> to vector<10x4xf32>
    %35 = arith.addf %33, %34 : vector<10x4xf32>
    %cst_6 = arith.constant dense<0xFF800000> : vector<4xf32>
    %36 = vector.multi_reduction <maximumf>, %35, %cst_6 [0] : vector<10x4xf32> to vector<4xf32>
    %37 = vector.shape_cast %36 : vector<4xf32> to vector<1x4xf32>
    %38 = vector.extract_strided_slice %2 {offsets = [12, 12], sizes = [9, 4], strides = [1, 1]} : vector<24x48xf32> to vector<9x4xf32>
    %39 = vector.extract_strided_slice %2 {offsets = [13, 16], sizes = [9, 4], strides = [1, 1]} : vector<24x48xf32> to vector<9x4xf32>
    %40 = arith.addf %38, %39 : vector<9x4xf32>
    %41 = vector.extract_strided_slice %2 {offsets = [14, 20], sizes = [9, 4], strides = [1, 1]} : vector<24x48xf32> to vector<9x4xf32>
    %42 = arith.addf %40, %41 : vector<9x4xf32>
    %43 = vector.extract_strided_slice %2 {offsets = [15, 24], sizes = [9, 4], strides = [1, 1]} : vector<24x48xf32> to vector<9x4xf32>
    %44 = arith.addf %42, %43 : vector<9x4xf32>
    %cst_7 = arith.constant dense<0xFF800000> : vector<4xf32>
    %45 = vector.multi_reduction <maximumf>, %44, %cst_7 [0] : vector<9x4xf32> to vector<4xf32>
    %46 = vector.shape_cast %45 : vector<4xf32> to vector<1x4xf32>
    %47 = vector.extract_strided_slice %2 {offsets = [12, 28], sizes = [8, 4], strides = [1, 1]} : vector<24x48xf32> to vector<8x4xf32>
    %48 = vector.extract_strided_slice %2 {offsets = [13, 32], sizes = [8, 4], strides = [1, 1]} : vector<24x48xf32> to vector<8x4xf32>
    %49 = arith.addf %47, %48 : vector<8x4xf32>
    %50 = vector.extract_strided_slice %2 {offsets = [14, 36], sizes = [8, 4], strides = [1, 1]} : vector<24x48xf32> to vector<8x4xf32>
    %51 = arith.addf %49, %50 : vector<8x4xf32>
    %52 = vector.extract_strided_slice %2 {offsets = [15, 40], sizes = [8, 4], strides = [1, 1]} : vector<24x48xf32> to vector<8x4xf32>
    %53 = arith.addf %51, %52 : vector<8x4xf32>
    %54 = vector.extract_strided_slice %2 {offsets = [16, 44], sizes = [8, 4], strides = [1, 1]} : vector<24x48xf32> to vector<8x4xf32>
    %55 = arith.addf %53, %54 : vector<8x4xf32>
    %cst_8 = arith.constant dense<0xFF800000> : vector<4xf32>
    %56 = vector.multi_reduction <maximumf>, %55, %cst_8 [0] : vector<8x4xf32> to vector<4xf32>
    %57 = vector.shape_cast %56 : vector<4xf32> to vector<1x4xf32>
    %58 = tpu.concatenate %37, %46, %57 in 1 : vector<1x4xf32>, vector<1x4xf32>, vector<1x4xf32> -> vector<1x12xf32>
    %59 = tpu.concatenate %30, %58 in 0 : vector<1x12xf32>, vector<1x12xf32> -> vector<2x12xf32>
    %c0_9 = arith.constant 0 : index
    %c0_10 = arith.constant 0 : index
    %60 = vector.load %arg4[%c0_9, %c0_10] : memref<1x12xf32, #tpu.memory_space<vmem>>, vector<1x12xf32>
    %61 = vector.broadcast %60 : vector<1x12xf32> to vector<2x12xf32>
    %62 = arith.addf %59, %61 : vector<2x12xf32>
    %cst_11 = arith.constant 0.000000e+00 : f32
    %63 = vector.broadcast %cst_11 : f32 to vector<2x12xf32>
    %64 = arith.maximumf %62, %63 : vector<2x12xf32>
    %c0_12 = arith.constant 0 : index
    %c0_13 = arith.constant 0 : index
    %65 = vector.load %arg5[%c0_12, %c0_13] : memref<12x64xf32, #tpu.memory_space<vmem>>, vector<12x64xf32>
    %cst_14 = arith.constant dense<0.000000e+00> : vector<2x64xf32>
    %66 = tpu.matmul %64, %65, %cst_14 {dimension_numbers = #tpu.dot_dimension_numbers<[1], [0], [0], [1], [0, 0, 1, 1], [], []>} : vector<2x12xf32>, vector<12x64xf32>, vector<2x64xf32> -> vector<2x64xf32>
    %c0_15 = arith.constant 0 : index
    %c0_16 = arith.constant 0 : index
    %67 = vector.load %arg6[%c0_15, %c0_16] : memref<1x64xf32, #tpu.memory_space<vmem>>, vector<1x64xf32>
    %68 = vector.broadcast %67 : vector<1x64xf32> to vector<2x64xf32>
    %69 = arith.addf %66, %68 : vector<2x64xf32>
    %70 = vector.extract_strided_slice %69 {offsets = [0, 0], sizes = [2, 32], strides = [1, 1]} : vector<2x64xf32> to vector<2x32xf32>
    %71 = vector.extract_strided_slice %69 {offsets = [0, 32], sizes = [2, 32], strides = [1, 1]} : vector<2x64xf32> to vector<2x32xf32>
    %c0_17 = arith.constant 0 : index
    %c0_18 = arith.constant 0 : index
    %72 = vector.load %arg2[%c0_17, %c0_18] : memref<2x6xf32, #tpu.memory_space<vmem>>, vector<2x6xf32>
    %73 = vector.extract_strided_slice %72 {offsets = [0, 0], sizes = [2, 3], strides = [1, 1]} : vector<2x6xf32> to vector<2x3xf32>
    %74 = vector.extract_strided_slice %72 {offsets = [0, 3], sizes = [2, 1], strides = [1, 1]} : vector<2x6xf32> to vector<2x1xf32>
    %c0_19 = arith.constant 0 : index
    %c0_20 = arith.constant 0 : index
    %75 = vector.load %arg7[%c0_19, %c0_20] : memref<32x1xf32, #tpu.memory_space<vmem>>, vector<32x1xf32>
    %cst_21 = arith.constant dense<0.000000e+00> : vector<2x1xf32>
    %76 = tpu.matmul %70, %75, %cst_21 {dimension_numbers = #tpu.dot_dimension_numbers<[1], [0], [0], [1], [0, 0, 1, 1], [], []>} : vector<2x32xf32>, vector<32x1xf32>, vector<2x1xf32> -> vector<2x1xf32>
    %c0_22 = arith.constant 0 : index
    %c0_23 = arith.constant 0 : index
    %77 = vector.load %arg8[%c0_22, %c0_23] : memref<3x1xf32, #tpu.memory_space<vmem>>, vector<3x1xf32>
    %cst_24 = arith.constant dense<0.000000e+00> : vector<2x1xf32>
    %78 = tpu.matmul %73, %77, %cst_24 {dimension_numbers = #tpu.dot_dimension_numbers<[1], [0], [0], [1], [0, 0, 1, 1], [], []>} : vector<2x3xf32>, vector<3x1xf32>, vector<2x1xf32> -> vector<2x1xf32>
    %79 = arith.addf %76, %78 : vector<2x1xf32>
    %c0_25 = arith.constant 0 : index
    %c0_26 = arith.constant 0 : index
    %80 = vector.load %arg9[%c0_25, %c0_26] : memref<1x1xf32, #tpu.memory_space<vmem>>, vector<1x1xf32>
    %81 = vector.broadcast %80 : vector<1x1xf32> to vector<2x1xf32>
    %82 = arith.addf %79, %81 : vector<2x1xf32>
    %83 = math.exp %71 : vector<2x32xf32>
    %84 = arith.mulf %70, %70 : vector<2x32xf32>
    %85 = arith.addf %83, %84 : vector<2x32xf32>
    %86 = arith.subf %85, %71 : vector<2x32xf32>
    %cst_27 = arith.constant 1.000000e+00 : f32
    %87 = vector.broadcast %cst_27 : f32 to vector<2x32xf32>
    %88 = arith.subf %86, %87 : vector<2x32xf32>
    %cst_28 = arith.constant 5.000000e-01 : f32
    %89 = vector.broadcast %cst_28 : f32 to vector<2x32xf32>
    %90 = arith.mulf %88, %89 : vector<2x32xf32>
    %cst_29 = arith.constant dense<0.000000e+00> : vector<2xf32>
    %91 = vector.multi_reduction <add>, %90, %cst_29 [1] : vector<2x32xf32> to vector<2xf32>
    %92 = vector.shape_cast %91 : vector<2xf32> to vector<2x1xf32>
    %cst_30 = arith.constant dense<0.000000e+00> : vector<1xf32>
    %93 = vector.multi_reduction <add>, %92, %cst_30 [0] : vector<2x1xf32> to vector<1xf32>
    %94 = vector.shape_cast %93 : vector<1xf32> to vector<1x1xf32>
    %cst_31 = arith.constant 2.000000e+00 : f32
    %95 = vector.broadcast %cst_31 : f32 to vector<1x1xf32>
    %96 = arith.divf %94, %95 : vector<1x1xf32>
    %cst_32 = arith.constant -5.000000e-01 : f32
    %97 = vector.broadcast %cst_32 : f32 to vector<2x32xf32>
    %98 = arith.mulf %97, %71 : vector<2x32xf32>
    %99 = math.exp %98 : vector<2x32xf32>
    %cst_33 = arith.constant dense<0.000000e+00> : vector<2xf32>
    %100 = vector.multi_reduction <add>, %99, %cst_33 [1] : vector<2x32xf32> to vector<2xf32>
    %101 = vector.shape_cast %100 : vector<2xf32> to vector<2x1xf32>
    %cst_34 = arith.constant 3.200000e+01 : f32
    %102 = vector.broadcast %cst_34 : f32 to vector<2x1xf32>
    %103 = arith.divf %102, %101 : vector<2x1xf32>
    %cst_35 = arith.constant dense<0.000000e+00> : vector<1xf32>
    %104 = vector.multi_reduction <add>, %103, %cst_35 [0] : vector<2x1xf32> to vector<1xf32>
    %105 = vector.shape_cast %104 : vector<1xf32> to vector<1x1xf32>
    %cst_36 = arith.constant 2.000000e+00 : f32
    %106 = vector.broadcast %cst_36 : f32 to vector<1x1xf32>
    %107 = arith.divf %105, %106 : vector<1x1xf32>
    %cst_37 = arith.constant 0.000000e+00 : f32
    %108 = vector.broadcast %cst_37 : f32 to vector<2x1xf32>
    %109 = arith.maximumf %82, %108 : vector<2x1xf32>
    %110 = arith.mulf %82, %74 : vector<2x1xf32>
    %111 = arith.subf %109, %110 : vector<2x1xf32>
    %112 = math.absf %82 : vector<2x1xf32>
    %cst_38 = arith.constant 0.000000e+00 : f32
    %113 = vector.broadcast %cst_38 : f32 to vector<2x1xf32>
    %114 = arith.subf %113, %112 : vector<2x1xf32>
    %115 = math.exp %114 : vector<2x1xf32>
    %116 = math.log1p %115 : vector<2x1xf32>
    %117 = arith.addf %111, %116 : vector<2x1xf32>
    %118 = vector.shape_cast %117 : vector<2x1xf32> to vector<1x2x1xf32>
    %cst_39 = arith.constant dense<0.000000e+00> : vector<1xf32>
    %119 = vector.multi_reduction <add>, %118, %cst_39 [1, 2] : vector<1x2x1xf32> to vector<1xf32>
    %120 = vector.shape_cast %119 : vector<1xf32> to vector<1x1x1xf32>
    %121 = vector.extract %120[0, 0, 0] : f32 from vector<1x1x1xf32>
    %122 = vector.broadcast %121 : f32 to vector<1x1xf32>
    %cst_40 = arith.constant 2.000000e+00 : f32
    %123 = vector.broadcast %cst_40 : f32 to vector<1x1xf32>
    %124 = arith.divf %122, %123 : vector<1x1xf32>
    %c0_41 = arith.constant 0 : index
    %c0_42 = arith.constant 0 : index
    %125 = vector.load %arg10[%c0_41, %c0_42] : memref<2x1xf32, #tpu.memory_space<vmem>>, vector<2x1xf32>
    tpu.vector_store %arg10[%c0_41, %c0_42], %82 {strides = array<i32>} : memref<2x1xf32, #tpu.memory_space<vmem>>, vector<2x1xf32>,
    %cst_43 = arith.constant 9.99999974E-5 : f32
    %126 = vector.broadcast %cst_43 : f32 to vector<1x1xf32>
    %127 = arith.mulf %126, %96 : vector<1x1xf32>
    %cst_44 = arith.constant 1.000000e-01 : f32
    %128 = vector.broadcast %cst_44 : f32 to vector<1x1xf32>
    %129 = arith.mulf %128, %107 : vector<1x1xf32>
    %130 = arith.addf %127, %129 : vector<1x1xf32>
    %131 = arith.addf %130, %124 : vector<1x1xf32>
    %c0_45 = arith.constant 0 : index
    %c0_46 = arith.constant 0 : index
    %132 = vector.load %arg11[%c0_45, %c0_46] : memref<1x1xf32, #tpu.memory_space<vmem>>, vector<1x1xf32>
    tpu.vector_store %arg11[%c0_45, %c0_46], %131 {strides = array<i32>} : memref<1x1xf32, #tpu.memory_space<vmem>>, vector<1x1xf32>,
    return
  }
  func.func @transform_0(%arg0: i32) -> (i32, i32) {
    %c0_i32 = arith.constant 0 : i32
    %c0_i32_0 = arith.constant 0 : i32
    %c0_i32_1 = arith.constant 0 : i32
    return %c0_i32, %c0_i32_0 : i32, i32
  }
  func.func @transform_1(%arg0: i32) -> (i32, i32) {
    %c0_i32 = arith.constant 0 : i32
    %c0_i32_0 = arith.constant 0 : i32
    %c0_i32_1 = arith.constant 0 : i32
    return %c0_i32, %c0_i32_0 : i32, i32
  }
  func.func @transform_2(%arg0: i32) -> (i32, i32) {
    %c0_i32 = arith.constant 0 : i32
    %c0_i32_0 = arith.constant 0 : i32
    %c0_i32_1 = arith.constant 0 : i32
    return %c0_i32, %c0_i32_0 : i32, i32
  }
  func.func @transform_3(%arg0: i32) -> (i32, i32) {
    %c0_i32 = arith.constant 0 : i32
    %c0_i32_0 = arith.constant 0 : i32
    %c0_i32_1 = arith.constant 0 : i32
    return %c0_i32, %c0_i32_0 : i32, i32
  }
  func.func @transform_4(%arg0: i32) -> (i32, i32) {
    %c0_i32 = arith.constant 0 : i32
    %c0_i32_0 = arith.constant 0 : i32
    %c0_i32_1 = arith.constant 0 : i32
    return %c0_i32, %c0_i32_0 : i32, i32
  }
  func.func @transform_5(%arg0: i32) -> (i32, i32) {
    %c0_i32 = arith.constant 0 : i32
    %c0_i32_0 = arith.constant 0 : i32
    %c0_i32_1 = arith.constant 0 : i32
    return %c0_i32, %c0_i32_0 : i32, i32
  }
  func.func @transform_6(%arg0: i32) -> (i32, i32) {
    %c0_i32 = arith.constant 0 : i32
    %c0_i32_0 = arith.constant 0 : i32
    %c0_i32_1 = arith.constant 0 : i32
    return %c0_i32, %c0_i32_0 : i32, i32
  }
  func.func @transform_7(%arg0: i32) -> (i32, i32) {
    %c0_i32 = arith.constant 0 : i32
    %c0_i32_0 = arith.constant 0 : i32
    %c0_i32_1 = arith.constant 0 : i32
    return %c0_i32, %c0_i32_0 : i32, i32
  }
  func.func @transform_8(%arg0: i32) -> (i32, i32) {
    %c0_i32 = arith.constant 0 : i32
    %c0_i32_0 = arith.constant 0 : i32
    %c0_i32_1 = arith.constant 0 : i32
    return %c0_i32, %c0_i32_0 : i32, i32
  }
  func.func @transform_9(%arg0: i32) -> (i32, i32) {
    %c0_i32 = arith.constant 0 : i32
    %c0_i32_0 = arith.constant 0 : i32
    %c0_i32_1 = arith.constant 0 : i32
    return %c0_i32, %c0_i32_0 : i32, i32
  }
  func.func @transform_10(%arg0: i32) -> (i32, i32) {
    %c0_i32 = arith.constant 0 : i32
    %c0_i32_0 = arith.constant 0 : i32
    %c0_i32_1 = arith.constant 0 : i32
    return %c0_i32, %c0_i32_0 : i32, i32
  }
}

</mosaic_0001>

<llo_original>
// kernel: tpu_custom_call.1
$region0: #{tpu_custom_call.1}
  #allocation0 [shape = 'u32[]', space=smem, size = 0x4, offset = 0x4, fixed_abs, tag = 'smem constant byte address 0x4 - core index']
  #allocation1 [shape = 'u32[144,128]{1,0:T(1,128)}', space=vmem, size = 0x12000, scoped, tag = 'internal scratch']
  #allocation2 [shape = 'f32[1,1]{1,0:T(1,128)S(1)}', space=vmem, size = 0x200, scoped, tag = 'scoped memory for tpu_custom_call.1']
  %s0 = inlined_call_operand.hbm [shape: f32[24,32], index: 0, kind: input, shape index: {}]
  %s1 = inlined_call_operand.hbm [shape: f32[2,6], index: 1, kind: input, shape index: {}]
  %s2 = inlined_call_operand.vmem [shape: f32[32,48], index: 2, kind: input, shape index: {}]
  %s3 = inlined_call_operand.vmem [shape: f32[1,12], index: 3, kind: input, shape index: {}]
  %s4 = inlined_call_operand.vmem [shape: f32[12,64], index: 4, kind: input, shape index: {}]
  %s5 = inlined_call_operand.vmem [shape: f32[1,64], index: 5, kind: input, shape index: {}]
  %s6 = inlined_call_operand.vmem [shape: f32[32,1], index: 6, kind: input, shape index: {}]
  %s7 = inlined_call_operand.vmem [shape: f32[3,1], index: 7, kind: input, shape index: {}]
  %s8 = inlined_call_operand.<no memory space> [shape: f32[1,1], index: 8, kind: input, shape index: {}]
  %s9 = inlined_call_operand.vmem [shape: f32[2,1], index: 9, kind: output, shape index: {0}]
  %s10 = inlined_call_operand.hbm [shape: f32[1,1], index: 10, kind: output, shape index: {1}]
  %11 = xla_tuple %s9, %s10
  %s12 = sld [smem:[#allocation0]]
  $region62: #{tpu_custom_call.1} parent=0
    _
  %s14 = ssub.s32 1, %s12
  %s15 = scalar_select 0, %s14, %s12
  %v16 = vstv %s8
  %17 = vst [vmem:[#allocation2] sm:$0x1] %v16
  $region1: #{tpu_custom_call.1} parent=0
    #allocation3 [shape = 'u8[12288]{0}', space=vmem, size = 0x3000, scoped, tag = 'input window, operand 0, single buffered']
    #allocation4 [shape = 's32[1]{0}', space=sflag, size = 0x4, scoped, tag = 'scoped memory for tpu_custom_call.1']
    #allocation5 [shape = 's32[1]{0}', space=sflag, size = 0x4, scoped, tag = 'scoped memory for tpu_custom_call.1']
    #allocation6 [shape = 'u8[1024]{0}', space=vmem, size = 0x400, scoped, tag = 'input window, operand 1, single buffered']
    #allocation7 [shape = 's32[1]{0}', space=sflag, size = 0x4, scoped, tag = 'scoped memory for tpu_custom_call.1']
    #allocation8 [shape = 'u8[512]{0}', space=vmem, size = 0x400, scoped, tag = 'output window, operand 1, single buffered']
    %18 = vsyncpa [#allocation4], 0
    %19 = vsyncpa [#allocation7], 0
    %20 = vsyncpa [#allocation5], 0
    // Predicated region
    $region2: #{tpu_custom_call.1} parent=1 // pred_check
      _
    $region3: #{tpu_custom_call.1} parent=1 // pred_check_branch
      %22 = sbr.rel (0) target = $region5
    $region4: #{tpu_custom_call.1} parent=1 // pred_region
      %s24 = ssub.s32 384, 384
      %25 = vsyncadd [#allocation4], %s24
      %s26 = sshll.u32 [#allocation3], 4
      %s27 = int_to_ptr.vmem [resolvable:$true] %s26
      %32 = dma.hbm_to_vmem [thread:$0]  %s0, 384, %s27, [#allocation4], 128, 128, 8
    $region5: #{tpu_custom_call.1} parent=1 // pred_fallthru
      _
    // Predicated region
    $region6: #{tpu_custom_call.1} parent=1 // pred_check
      _
    $region7: #{tpu_custom_call.1} parent=1 // pred_check_branch
      %34 = sbr.rel (0) target = $region9
    $region8: #{tpu_custom_call.1} parent=1 // pred_region
      %s36 = ssub.s32 32, 32
      %37 = vsyncadd [#allocation7], %s36
      %s39 = sshll.u32 [#allocation6], 4
      %s40 = int_to_ptr.vmem [resolvable:$true] %s39
      %42 = dma.hbm_to_vmem [thread:$0]  %s1, 32, %s40, [#allocation7]
    $region9: #{tpu_custom_call.1} parent=1 // pred_fallthru
      _
    // Predicated region
    $region10: #{tpu_custom_call.1} parent=1 // pred_check
      _
    $region11: #{tpu_custom_call.1} parent=1 // pred_check_branch
      %44 = sbr.rel (0) target = $region13
    $region12: #{tpu_custom_call.1} parent=1 // pred_region
      _
    $region13: #{tpu_custom_call.1} parent=1 // pred_fallthru
      _
    // Predicated region
    $region14: #{tpu_custom_call.1} parent=1 // pred_check
      _
    $region15: #{tpu_custom_call.1} parent=1 // pred_check_branch
      %46 = sbr.rel (0) target = $region17
    $region16: #{tpu_custom_call.1} parent=1 // pred_region
      _
    $region17: #{tpu_custom_call.1} parent=1 // pred_fallthru
      _
    // Predicated region
    $region18: #{tpu_custom_call.1} parent=1 // pred_check
      _
    $region19: #{tpu_custom_call.1} parent=1 // pred_check_branch
      %48 = sbr.rel (0) target = $region21
    $region20: #{tpu_custom_call.1} parent=1 // pred_region
      _
    $region21: #{tpu_custom_call.1} parent=1 // pred_fallthru
      _
    // Predicated region
    $region22: #{tpu_custom_call.1} parent=1 // pred_check
      _
    $region23: #{tpu_custom_call.1} parent=1 // pred_check_branch
      %50 = sbr.rel (0) target = $region25
    $region24: #{tpu_custom_call.1} parent=1 // pred_region
      _
    $region25: #{tpu_custom_call.1} parent=1 // pred_fallthru
      _
    // Predicated region
    $region26: #{tpu_custom_call.1} parent=1 // pred_check
      _
    $region27: #{tpu_custom_call.1} parent=1 // pred_check_branch
      %52 = sbr.rel (0) target = $region29
    $region28: #{tpu_custom_call.1} parent=1 // pred_region
      _
    $region29: #{tpu_custom_call.1} parent=1 // pred_fallthru
      _
    // Predicated region
    $region30: #{tpu_custom_call.1} parent=1 // pred_check
      _
    $region31: #{tpu_custom_call.1} parent=1 // pred_check_branch
      %54 = sbr.rel (0) target = $region33
    $region32: #{tpu_custom_call.1} parent=1 // pred_region
      _
    $region33: #{tpu_custom_call.1} parent=1 // pred_fallthru
      _
    // Predicated region
    $region34: #{tpu_custom_call.1} parent=1 // pred_check
      _
    $region35: #{tpu_custom_call.1} parent=1 // pred_check_branch
      %56 = sbr.rel (0) target = $region37
    $region36: #{tpu_custom_call.1} parent=1 // pred_region
      _
    $region37: #{tpu_custom_call.1} parent=1 // pred_fallthru
      _
    // Predicated region
    $region38: #{tpu_custom_call.1} parent=1 // pred_check
      _
    $region39: #{tpu_custom_call.1} parent=1 // pred_check_branch
      %58 = sbr.rel (0) target = $region41
    $region40: #{tpu_custom_call.1} parent=1 // pred_region
      %59 = dma.done [#allocation4], 384
    $region41: #{tpu_custom_call.1} parent=1 // pred_fallthru
      _
    // Predicated region
    $region42: #{tpu_custom_call.1} parent=1 // pred_check
      _
    $region43: #{tpu_custom_call.1} parent=1 // pred_check_branch
      %61 = sbr.rel (0) target = $region45
    $region44: #{tpu_custom_call.1} parent=1 // pred_region
      %62 = dma.done [#allocation7], 32
    $region45: #{tpu_custom_call.1} parent=1 // pred_fallthru
      _
    %v63 = vld [vmem:[#allocation3] sm:$0xff]
    %v64 = vld [vmem:[#allocation3 + $0x8] sm:$0xff]
    %v65 = vld [vmem:[#allocation3 + $0x10] sm:$0xff]
    %v66 = vld [vmem:[%s2] sm:$0xff]
    %v67 = vld [vmem:[%s2 + $0x8] sm:$0xff]
    %v68 = vld [vmem:[%s2 + $0x10] sm:$0xff]
    %v69 = vld [vmem:[%s2 + $0x18] sm:$0xff]
    %vm70 = vcmask 261120
    %v72 = vsel %vm70, %v63, 0
    %v75 = vsel %vm70, %v64, 0
    %v78 = vsel %vm70, %v65, 0
    %80 = vmatprep.subr.mxu0 0.0
    %81 = vmatpush1.msra.mxu0 %v66
    %82 = vmatprep.subr.mxu0 0.0
    %83 = vmatpush1.msra.mxu0 %v67
    %84 = vmatprep.subr.mxu0 0.0
    %85 = vmatpush1.msra.mxu0 %v68
    %86 = vmatprep.subr.mxu0 0.0
    %87 = vmatpush1.msra.mxu0 %v69
    %88 = vmatprep.subr.mxu0 0.0
    %89 = vmatpush1.msra.mxu0 0.0
    %90 = vmatprep.subr.mxu0 0.0
    %91 = vmatpush1.msra.mxu0 0.0
    %92 = vmatprep.subr.mxu0 0.0
    %93 = vmatpush1.msra.mxu0 0.0
    %94 = vmatprep.subr.mxu0 0.0
    %95 = vmatpush1.msra.mxu0 0.0
    %96 = vmatprep.subr.mxu0 0.0
    %97 = vmatpush1.msra.mxu0 0.0
    %98 = vmatprep.subr.mxu0 0.0
    %99 = vmatpush1.msra.mxu0 0.0
    %100 = vmatprep.subr.mxu0 0.0
    %101 = vmatpush1.msra.mxu0 0.0
    %102 = vmatprep.subr.mxu0 0.0
    %103 = vmatpush1.msra.mxu0 0.0
    %104 = vmatprep.subr.mxu0 0.0
    %105 = vmatpush1.msra.mxu0 0.0
    %106 = vmatprep.subr.mxu0 0.0
    %107 = vmatpush1.msra.mxu0 0.0
    %108 = vmatprep.subr.mxu0 0.0
    %109 = vmatpush1.msra.mxu0 0.0
    %110 = vmatprep.subr.mxu0 0.0
    %111 = vmatpush1.msra.mxu0 0.0
    %112 = vmatprep.subr.mxu0 0.0
    %113 = vmatpush1.msra.mxu0 0.0
    %114 = vmatprep.subr.mxu0 0.0
    %115 = vmatpush1.msra.mxu0 0.0
    %116 = vmatprep.subr.mxu0 0.0
    %117 = vmatpush1.msra.mxu0 0.0
    %118 = vmatprep.subr.mxu0 0.0
    %119 = vmatpush1.msra.mxu0 0.0
    %120 = vmatprep.subr.mxu0 0.0
    %121 = vmatpush1.msra.mxu0 0.0
    %122 = vmatprep.subr.mxu0 0.0
    %123 = vmatpush1.msra.mxu0 0.0
    %124 = vmatprep.subr.mxu0 0.0
    %125 = vmatpush1.msra.mxu0 0.0
    %126 = vmatprep.subr.mxu0 0.0
    %127 = vmatpush1.msra.mxu0 0.0
    %128 = vmatprep.subr.mxu0 0.0
    %129 = vmatpush1.msra.mxu0 0.0
    %130 = vmatprep.subr.mxu0 0.0
    %131 = vmatpush1.msra.mxu0 0.0
    %132 = vmatprep.subr.mxu0 0.0
    %133 = vmatpush1.msra.mxu0 0.0
    %134 = vmatprep.subr.mxu0 0.0
    %135 = vmatpush1.msra.mxu0 0.0
    %136 = vmatprep.subr.mxu0 0.0
    %137 = vmatpush1.msra.mxu0 0.0
    %138 = vmatprep.subr.mxu0 0.0
    %139 = vmatpush1.msra.mxu0 0.0
    %140 = vmatprep.subr.mxu0 0.0
    %141 = vmatpush1.msra.mxu0 0.0
    %142 = vmatprep.subr.mxu0 0.0
    %143 = vmatpush1.msra.mxu0 0.0
    %144 = vmatprep.mubr.f32.mxu0 0.0
    %145 = vmatmul.mubr.f32.gmra.mrb[0].mxu0 %v72
    %v146 = vpop.f32.mrb[0].mxu0
    %v147 = vadd.f32 0.0, %v146
    %v148 = vpop.f32.mrb[0].mxu0
    %149 = vmatprep.mubr.f32.mxu0 0.0
    %150 = vmatmul.mubr.f32.gmra.mrb[0].mxu0 %v75
    %v151 = vpop.f32.mrb[0].mxu0
    %v152 = vadd.f32 0.0, %v151
    %v153 = vpop.f32.mrb[0].mxu0
    %154 = vmatprep.mubr.f32.mxu0 0.0
    %155 = vmatmul.mubr.f32.gmra.mrb[0].mxu0 %v78
    %v156 = vpop.f32.mrb[0].mxu0
    %v157 = vadd.f32 0.0, %v156
    %v158 = vpop.f32.mrb[0].mxu0
    %159 = vdwg.mxu0
    %vm162 = vcmask 1046528
    %v163 = vrot.slane %v147, 1
    %v164 = vrot.slane %v152, 1
    %v165 = vsel %vm162, %v163, %v164
    %166 = vrot.lane.b32.xlu0 %v165, 124
    %v167 = vpop.permute.xlu0 %166
    %168 = vrot.lane.b32.xlu0 %v164, 124
    %v169 = vpop.permute.xlu0 %168
    %v172 = vadd.f32 %v147, %v167
    %v173 = vadd.f32 %v152, %v169
    %vm174 = vcmask 1045504
    %v175 = vrot.slane %v147, 2
    %v176 = vrot.slane %v152, 2
    %v177 = vsel %vm174, %v175, %v176
    %178 = vrot.lane.b32.xlu0 %v177, 120
    %v179 = vpop.permute.xlu0 %178
    %180 = vrot.lane.b32.xlu0 %v176, 120
    %v181 = vpop.permute.xlu0 %180
    %v184 = vadd.f32 %v172, %v179
    %v185 = vadd.f32 %v173, %v181
    %vm186 = vcmask 31744
    %v187 = vsel %vm186, %v184, -inf
    %vm188 = vcmask 25600
    %v189 = vsel %vm188, %v185, -inf
    %v190 = vmax.f32 %v187, %v189
    %v191 = vrot.slane %v190, 4
    %v192 = vmax.f32 %v190, %v191
    %v193 = vrot.slane %v192, 2
    %v194 = vmax.f32 %v192, %v193
    %v195 = vrot.slane %v194, 1
    %v196 = vmax.f32 %v194, %v195
    %vm197 = vcmask 1044480
    %v198 = vrot.slane %v147, 3
    %v199 = vrot.slane %v152, 3
    %v200 = vsel %vm197, %v198, %v199
    %201 = vrot.lane.b32.xlu0 %v200, 116
    %v202 = vpop.permute.xlu0 %201
    %203 = vrot.lane.b32.xlu0 %v199, 116
    %v204 = vpop.permute.xlu0 %203
    %v207 = vadd.f32 %v184, %v202
    %v208 = vadd.f32 %v185, %v204
    %vm209 = vcmask 130144
    %v210 = vsel %vm209, %v207, -inf
    %vm211 = vcmask 122976
    %v212 = vsel %vm211, %v208, -inf
    %v213 = vmax.f32 %v210, %v212
    %v214 = vrot.slane %v213, 4
    %v215 = vmax.f32 %v213, %v214
    %v216 = vrot.slane %v215, 2
    %v217 = vmax.f32 %v215, %v216
    %v218 = vrot.slane %v217, 1
    %v219 = vmax.f32 %v217, %v218
    %vm220 = vcmask 1043456
    %v221 = vrot.slane %v147, 4
    %v222 = vrot.slane %v152, 4
    %v223 = vsel %vm220, %v221, %v222
    %224 = vrot.lane.b32.xlu0 %v223, 112
    %v225 = vpop.permute.xlu0 %224
    %v227 = vadd.f32 %v207, %v225
    %vm228 = vcmask 261344
    %v229 = vsel %vm228, %v227, -inf
    %v230 = vrot.slane %v229, 4
    %v231 = vmax.f32 %v229, %v230
    %v232 = vrot.slane %v231, 2
    %v233 = vmax.f32 %v231, %v232
    %v234 = vrot.slane %v233, 1
    %v235 = vmax.f32 %v233, %v234
    %237 = vrot.lane.b32.xlu0 %v219, 120
    %v238 = vpop.permute.xlu0 %237
    %241 = vrot.lane.b32.xlu0 %v235, 108
    %v242 = vpop.permute.xlu0 %241
    %v244 = vsel %vm186, %v196, %v238
    %vm245 = vcmask 64512
    %v246 = vsel %vm245, %v244, %v242
    %v248 = vrot.slane %v157, 1
    %v249 = vsel %vm162, %v164, %v248
    %250 = vrot.lane.b32.xlu0 %v249, 124
    %v251 = vpop.permute.xlu0 %250
    %252 = vrot.lane.b32.xlu0 %v248, 124
    %v253 = vpop.permute.xlu0 %252
    %v256 = vadd.f32 %v152, %v251
    %v257 = vadd.f32 %v157, %v253
    %v258 = vrot.slane %v157, 2
    %v259 = vsel %vm174, %v176, %v258
    %260 = vrot.lane.b32.xlu0 %v259, 120
    %v261 = vpop.permute.xlu0 %260
    %262 = vrot.lane.b32.xlu0 %v258, 120
    %v263 = vpop.permute.xlu0 %262
    %v266 = vadd.f32 %v256, %v261
    %v267 = vadd.f32 %v257, %v263
    %vm268 = vcmask 31748
    %v269 = vsel %vm268, %v266, -inf
    %vm270 = vcmask 29696
    %v271 = vsel %vm270, %v267, -inf
    %v272 = vmax.f32 %v269, %v271
    %v273 = vrot.slane %v272, 4
    %v274 = vmax.f32 %v272, %v273
    %v275 = vrot.slane %v274, 2
    %v276 = vmax.f32 %v274, %v275
    %v277 = vrot.slane %v276, 1
    %v278 = vmax.f32 %v276, %v277
    %v279 = vrot.slane %v157, 3
    %v280 = vsel %vm197, %v199, %v279
    %281 = vrot.lane.b32.xlu0 %v280, 116
    %v282 = vpop.permute.xlu0 %281
    %283 = vrot.lane.b32.xlu0 %v279, 116
    %v284 = vpop.permute.xlu0 %283
    %v287 = vadd.f32 %v266, %v282
    %v288 = vadd.f32 %v267, %v284
    %vm289 = vcmask 130148
    %v290 = vsel %vm289, %v287, -inf
    %vm291 = vcmask 127072
    %v292 = vsel %vm291, %v288, -inf
    %v293 = vmax.f32 %v290, %v292
    %v294 = vrot.slane %v293, 4
    %v295 = vmax.f32 %v293, %v294
    %v296 = vrot.slane %v295, 2
    %v297 = vmax.f32 %v295, %v296
    %v298 = vrot.slane %v297, 1
    %v299 = vmax.f32 %v297, %v298
    %v300 = vrot.slane %v157, 4
    %301 = vrot.lane.b32.xlu0 %v300, 112
    %v302 = vpop.permute.xlu0 %301
    %v304 = vadd.f32 %v287, %v302
    %v305 = vadd.f32 %v288, %v302
    %vm306 = vcmask 261348
    %v307 = vsel %vm306, %v304, -inf
    %vm308 = vcmask 257248
    %v309 = vsel %vm308, %v305, -inf
    %v310 = vmax.f32 %v307, %v309
    %v311 = vrot.slane %v310, 4
    %v312 = vmax.f32 %v310, %v311
    %v313 = vrot.slane %v312, 2
    %v314 = vmax.f32 %v312, %v313
    %v315 = vrot.slane %v314, 1
    %v316 = vmax.f32 %v314, %v315
    %318 = vrot.lane.b32.xlu0 %v299, 120
    %v319 = vpop.permute.xlu0 %318
    %322 = vrot.lane.b32.xlu0 %v316, 108
    %v323 = vpop.permute.xlu0 %322
    %v325 = vsel %vm186, %v278, %v319
    %v326 = vsel %vm245, %v325, %v323
    %v328 = vrot.slane %v326, 7
    %vm330 = vcmask 1040384
    %v331 = vsel %vm330, %v246, %v328
    %v332 = vld [vmem:[%s3] sm:$0x1]
    %v334 = vlaneseq
    %v335 = vshrl.u32 %v334, 7
    %v336 = vsub.s32 0, %v335
    %v337 = vrot.slane %v332, %v336
    %v339 = vadd.f32 %v331, %v337
    %v340 = vmax.f32 %v339, 0.0
    %v341 = vld [vmem:[%s4] sm:$0xff]
    %v342 = vld [vmem:[%s4 + $0x8] sm:$0xf]
    %v343 = vld [vmem:[%s5] sm:$0x1]
    %v345 = vlaneseq
    %v346 = vshrl.u32 %v345, 7
    %v347 = vsub.s32 0, %v346
    %v348 = vrot.slane %v343, %v347
    %vm350 = vcmask 97280
    %v352 = vsel %vm350, %v340, 0
    %v355 = vsel %vm220, %v342, 0
    %357 = vmatprep.subr.mxu0 0.0
    %358 = vmatpush1.msra.mxu0 %v341
    %359 = vmatprep.subr.mxu0 0.0
    %360 = vmatpush1.msra.mxu0 %v355
    %361 = vmatprep.subr.mxu0 0.0
    %362 = vmatpush1.msra.mxu0 0.0
    %363 = vmatprep.subr.mxu0 0.0
    %364 = vmatpush1.msra.mxu0 0.0
    %365 = vmatprep.subr.mxu0 0.0
    %366 = vmatpush1.msra.mxu0 0.0
    %367 = vmatprep.subr.mxu0 0.0
    %368 = vmatpush1.msra.mxu0 0.0
    %369 = vmatprep.subr.mxu0 0.0
    %370 = vmatpush1.msra.mxu0 0.0
    %371 = vmatprep.subr.mxu0 0.0
    %372 = vmatpush1.msra.mxu0 0.0
    %373 = vmatprep.subr.mxu0 0.0
    %374 = vmatpush1.msra.mxu0 0.0
    %375 = vmatprep.subr.mxu0 0.0
    %376 = vmatpush1.msra.mxu0 0.0
    %377 = vmatprep.subr.mxu0 0.0
    %378 = vmatpush1.msra.mxu0 0.0
    %379 = vmatprep.subr.mxu0 0.0
    %380 = vmatpush1.msra.mxu0 0.0
    %381 = vmatprep.subr.mxu0 0.0
    %382 = vmatpush1.msra.mxu0 0.0
    %383 = vmatprep.subr.mxu0 0.0
    %384 = vmatpush1.msra.mxu0 0.0
    %385 = vmatprep.subr.mxu0 0.0
    %386 = vmatpush1.msra.mxu0 0.0
    %387 = vmatprep.subr.mxu0 0.0
    %388 = vmatpush1.msra.mxu0 0.0
    %389 = vmatprep.subr.mxu0 0.0
    %390 = vmatpush1.msra.mxu0 0.0
    %391 = vmatprep.subr.mxu0 0.0
    %392 = vmatpush1.msra.mxu0 0.0
    %393 = vmatprep.subr.mxu0 0.0
    %394 = vmatpush1.msra.mxu0 0.0
    %395 = vmatprep.subr.mxu0 0.0
    %396 = vmatpush1.msra.mxu0 0.0
    %397 = vmatprep.subr.mxu0 0.0
    %398 = vmatpush1.msra.mxu0 0.0
    %399 = vmatprep.subr.mxu0 0.0
    %400 = vmatpush1.msra.mxu0 0.0
    %401 = vmatprep.subr.mxu0 0.0
    %402 = vmatpush1.msra.mxu0 0.0
    %403 = vmatprep.subr.mxu0 0.0
    %404 = vmatpush1.msra.mxu0 0.0
    %405 = vmatprep.subr.mxu0 0.0
    %406 = vmatpush1.msra.mxu0 0.0
    %407 = vmatprep.subr.mxu0 0.0
    %408 = vmatpush1.msra.mxu0 0.0
    %409 = vmatprep.subr.mxu0 0.0
    %410 = vmatpush1.msra.mxu0 0.0
    %411 = vmatprep.subr.mxu0 0.0
    %412 = vmatpush1.msra.mxu0 0.0
    %413 = vmatprep.subr.mxu0 0.0
    %414 = vmatpush1.msra.mxu0 0.0
    %415 = vmatprep.subr.mxu0 0.0
    %416 = vmatpush1.msra.mxu0 0.0
    %417 = vmatprep.subr.mxu0 0.0
    %418 = vmatpush1.msra.mxu0 0.0
    %419 = vmatprep.subr.mxu0 0.0
    %420 = vmatpush1.msra.mxu0 0.0
    %421 = vmatprep.mubr.f32.mxu0 0.0
    %422 = vmatmul.mubr.f32.gmra.mrb[0].mxu0 %v352
    %v423 = vpop.f32.mrb[0].mxu0
    %v424 = vadd.f32 %v348, %v423
    %v425 = vpop.f32.mrb[0].mxu0
    %426 = vdwg.mxu0
    %v427 = vld [vmem:[#allocation6] sm:$0x3]
    %v428 = vld [vmem:[%s6] sm:$0xff]
    %v429 = vld [vmem:[%s6 + $0x8] sm:$0xff]
    %v430 = vld [vmem:[%s6 + $0x10] sm:$0xff]
    %v431 = vld [vmem:[%s6 + $0x18] sm:$0xff]
    %v432 = vld [vmem:[%s7] sm:$0x7]
    %vm433 = vcmask 23552
    %v435 = vsel %vm433, %v427, 0
    %vm437 = vcmask 1042432
    %v439 = vsel %vm437, %v432, 0
    %441 = vmatprep.subr.mxu0 0.0
    %442 = vmatpush1.msra.mxu0 %v439
    %443 = vmatprep.subr.mxu0 0.0
    %444 = vmatpush1.msra.mxu0 0.0
    %445 = vmatprep.subr.mxu0 0.0
    %446 = vmatpush1.msra.mxu0 0.0
    %447 = vmatprep.subr.mxu0 0.0
    %448 = vmatpush1.msra.mxu0 0.0
    %449 = vmatprep.subr.mxu0 0.0
    %450 = vmatpush1.msra.mxu0 0.0
    %451 = vmatprep.subr.mxu0 0.0
    %452 = vmatpush1.msra.mxu0 0.0
    %453 = vmatprep.subr.mxu0 0.0
    %454 = vmatpush1.msra.mxu0 0.0
    %455 = vmatprep.subr.mxu0 0.0
    %456 = vmatpush1.msra.mxu0 0.0
    %457 = vmatprep.subr.mxu0 0.0
    %458 = vmatpush1.msra.mxu0 0.0
    %459 = vmatprep.subr.mxu0 0.0
    %460 = vmatpush1.msra.mxu0 0.0
    %461 = vmatprep.subr.mxu0 0.0
    %462 = vmatpush1.msra.mxu0 0.0
    %463 = vmatprep.subr.mxu0 0.0
    %464 = vmatpush1.msra.mxu0 0.0
    %465 = vmatprep.subr.mxu0 0.0
    %466 = vmatpush1.msra.mxu0 0.0
    %467 = vmatprep.subr.mxu0 0.0
    %468 = vmatpush1.msra.mxu0 0.0
    %469 = vmatprep.subr.mxu0 0.0
    %470 = vmatpush1.msra.mxu0 0.0
    %471 = vmatprep.subr.mxu0 0.0
    %472 = vmatpush1.msra.mxu0 0.0
    %473 = vmatprep.subr.mxu0 0.0
    %474 = vmatpush1.msra.mxu0 0.0
    %475 = vmatprep.subr.mxu0 0.0
    %476 = vmatpush1.msra.mxu0 0.0
    %477 = vmatprep.subr.mxu0 0.0
    %478 = vmatpush1.msra.mxu0 0.0
    %479 = vmatprep.subr.mxu0 0.0
    %480 = vmatpush1.msra.mxu0 0.0
    %481 = vmatprep.subr.mxu0 0.0
    %482 = vmatpush1.msra.mxu0 0.0
    %483 = vmatprep.subr.mxu0 0.0
    %484 = vmatpush1.msra.mxu0 0.0
    %485 = vmatprep.subr.mxu0 0.0
    %486 = vmatpush1.msra.mxu0 0.0
    %487 = vmatprep.subr.mxu0 0.0
    %488 = vmatpush1.msra.mxu0 0.0
    %489 = vmatprep.subr.mxu0 0.0
    %490 = vmatpush1.msra.mxu0 0.0
    %491 = vmatprep.subr.mxu0 0.0
    %492 = vmatpush1.msra.mxu0 0.0
    %493 = vmatprep.subr.mxu0 0.0
    %494 = vmatpush1.msra.mxu0 0.0
    %495 = vmatprep.subr.mxu0 0.0
    %496 = vmatpush1.msra.mxu0 0.0
    %497 = vmatprep.subr.mxu0 0.0
    %498 = vmatpush1.msra.mxu0 0.0
    %499 = vmatprep.subr.mxu0 0.0
    %500 = vmatpush1.msra.mxu0 0.0
    %501 = vmatprep.subr.mxu0 0.0
    %502 = vmatpush1.msra.mxu0 0.0
    %503 = vmatprep.subr.mxu0 0.0
    %504 = vmatpush1.msra.mxu0 0.0
    %505 = vmatprep.mubr.f32.mxu0 0.0
    %506 = vmatmul.mubr.f32.gmra.mrb[0].mxu0 %v435
    %v507 = vpop.f32.mrb[0].mxu0
    %v508 = vadd.f32 0.0, %v507
    %v509 = vpop.f32.mrb[0].mxu0
    %510 = vdwg.mxu0
    %v512 = vsel %vm70, %v424, 0
    %514 = vmatprep.subr.mxu0 0.0
    %515 = vmatpush1.msra.mxu0 %v428
    %516 = vmatprep.subr.mxu0 0.0
    %517 = vmatpush1.msra.mxu0 %v429
    %518 = vmatprep.subr.mxu0 0.0
    %519 = vmatpush1.msra.mxu0 %v430
    %520 = vmatprep.subr.mxu0 0.0
    %521 = vmatpush1.msra.mxu0 %v431
    %522 = vmatprep.subr.mxu0 0.0
    %523 = vmatpush1.msra.mxu0 0.0
    %524 = vmatprep.subr.mxu0 0.0
    %525 = vmatpush1.msra.mxu0 0.0
    %526 = vmatprep.subr.mxu0 0.0
    %527 = vmatpush1.msra.mxu0 0.0
    %528 = vmatprep.subr.mxu0 0.0
    %529 = vmatpush1.msra.mxu0 0.0
    %530 = vmatprep.subr.mxu0 0.0
    %531 = vmatpush1.msra.mxu0 0.0
    %532 = vmatprep.subr.mxu0 0.0
    %533 = vmatpush1.msra.mxu0 0.0
    %534 = vmatprep.subr.mxu0 0.0
    %535 = vmatpush1.msra.mxu0 0.0
    %536 = vmatprep.subr.mxu0 0.0
    %537 = vmatpush1.msra.mxu0 0.0
    %538 = vmatprep.subr.mxu0 0.0
    %539 = vmatpush1.msra.mxu0 0.0
    %540 = vmatprep.subr.mxu0 0.0
    %541 = vmatpush1.msra.mxu0 0.0
    %542 = vmatprep.subr.mxu0 0.0
    %543 = vmatpush1.msra.mxu0 0.0
    %544 = vmatprep.subr.mxu0 0.0
    %545 = vmatpush1.msra.mxu0 0.0
    %546 = vmatprep.subr.mxu0 0.0
    %547 = vmatpush1.msra.mxu0 0.0
    %548 = vmatprep.subr.mxu0 0.0
    %549 = vmatpush1.msra.mxu0 0.0
    %550 = vmatprep.subr.mxu0 0.0
    %551 = vmatpush1.msra.mxu0 0.0
    %552 = vmatprep.subr.mxu0 0.0
    %553 = vmatpush1.msra.mxu0 0.0
    %554 = vmatprep.subr.mxu0 0.0
    %555 = vmatpush1.msra.mxu0 0.0
    %556 = vmatprep.subr.mxu0 0.0
    %557 = vmatpush1.msra.mxu0 0.0
    %558 = vmatprep.subr.mxu0 0.0
    %559 = vmatpush1.msra.mxu0 0.0
    %560 = vmatprep.subr.mxu0 0.0
    %561 = vmatpush1.msra.mxu0 0.0
    %562 = vmatprep.subr.mxu0 0.0
    %563 = vmatpush1.msra.mxu0 0.0
    %564 = vmatprep.subr.mxu0 0.0
    %565 = vmatpush1.msra.mxu0 0.0
    %566 = vmatprep.subr.mxu0 0.0
    %567 = vmatpush1.msra.mxu0 0.0
    %568 = vmatprep.subr.mxu0 0.0
    %569 = vmatpush1.msra.mxu0 0.0
    %570 = vmatprep.subr.mxu0 0.0
    %571 = vmatpush1.msra.mxu0 0.0
    %572 = vmatprep.subr.mxu0 0.0
    %573 = vmatpush1.msra.mxu0 0.0
    %574 = vmatprep.subr.mxu0 0.0
    %575 = vmatpush1.msra.mxu0 0.0
    %576 = vmatprep.subr.mxu0 0.0
    %577 = vmatpush1.msra.mxu0 0.0
    %578 = vmatprep.mubr.f32.mxu0 0.0
    %579 = vmatmul.mubr.f32.gmra.mrb[0].mxu0 %v512
    %v580 = vpop.f32.mrb[0].mxu0
    %v581 = vadd.f32 %v508, %v580
    %v582 = vpop.f32.mrb[0].mxu0
    %583 = vdwg.mxu0
    %v584 = vld [vmem:[#allocation2] sm:$0x1]
    %v586 = vlaneseq
    %v587 = vshrl.u32 %v586, 7
    %v588 = vsub.s32 0, %v587
    %v589 = vrot.slane %v584, %v588
    %v591 = vadd.f32 %v581, %v589
    %v592 = vmul.f32 %v424, 1.442695
    %v593 = vpow.pop %v592
    %v594 = vmul.f32 %v424, %v424
    %596 = vrot.lane.b32.xlu0 %v594, 32
    %v597 = vpop.permute.xlu0 %596
    %v599 = vadd.f32 %v593, %v597
    %v600 = vsub.f32 %v599, %v424
    %v601 = vsub.f32 %v600, 1.0
    %v602 = vmul.f32 %v601, 0.5
    %604 = vrot.lane.b32.xlu0 %v602, 96
    %v605 = vpop.permute.xlu0 %604
    %vm607 = vcmask 254976
    %v608 = vsel %vm607, %v605, 0.0
    %609 = vadd.xlane.f32.xlu0 %v608
    %v610 = vpop.xlane.xlu0 %609
    %vm611 = vcmask 1041408
    %v612 = vsel %vm611, %v610, 0.0
    %v613 = vrot.slane %v612, 4
    %v614 = vadd.f32 %v612, %v613
    %v615 = vrot.slane %v614, 2
    %v616 = vadd.f32 %v614, %v615
    %v617 = vrot.slane %v616, 1
    %v618 = vadd.f32 %v616, %v617
    %v619 = vrcp.pop 2.0
    %v620 = vmul.f32 %v618, %v619
    %v621 = vmul.f32 %v424, -0.5
    %v622 = vmul.f32 %v621, 1.442695
    %v623 = vpow.pop %v622
    %625 = vrot.lane.b32.xlu0 %v623, 96
    %v626 = vpop.permute.xlu0 %625
    %v628 = vsel %vm607, %v626, 0.0
    %629 = vadd.xlane.f32.xlu0 %v628
    %v630 = vpop.xlane.xlu0 %629
    %v631 = vrcp.pop %v630
    %v632 = vmul.f32 32.0, %v631
    %v633 = vsel %vm611, %v632, 0.0
    %v634 = vrot.slane %v633, 4
    %v635 = vadd.f32 %v633, %v634
    %v636 = vrot.slane %v635, 2
    %v637 = vadd.f32 %v635, %v636
    %v638 = vrot.slane %v637, 1
    %v639 = vadd.f32 %v637, %v638
    %v640 = vmul.f32 %v639, %v619
    %v641 = vmax.f32 %v591, 0.0
    %642 = vrot.lane.b32.xlu0 %v427, 125
    %v643 = vpop.permute.xlu0 %642
    %v645 = vmul.f32 %v591, %v643
    %v646 = vsub.f32 %v641, %v645
    %v647 = vand.u32 2147483647, %v591
    %v648 = vsub.f32 0.0, %v647
    %v649 = vmul.f32 %v648, 1.442695
    %v650 = vpow.pop %v649
    %v651 = vadd.f32 %v650, 1.0
    %v652 = vlog2.pop %v651
    %v653 = vmul.f32 %v652, 0.6931472
    %v654 = vmul.f32 -0.5, %v650
    %v655 = vadd.f32 %v654, 1.0
    %v656 = vmul.f32 %v655, %v650
    %v657 = vand.u32 2147483647, %v650
    %vm658 = vcmp.lt.f32.partialorder %v657, 0.0004427343
    %v659 = vsel %vm658, %v656, %v653
    %v660 = vadd.f32 %v646, %v659
    %vm661 = vcmask 1024
    %v662 = vsel %vm661, %v660, 0.0
    %663 = vadd.xlane.f32.xlu0 %v662
    %v664 = vpop.xlane.xlu0 %663
    %v665 = vrot.slane %v664, 4
    %v666 = vadd.f32 %v664, %v665
    %v667 = vrot.slane %v666, 2
    %v668 = vadd.f32 %v666, %v667
    %v669 = vrot.slane %v668, 1
    %v670 = vadd.f32 %v668, %v669
    %s671 = vtos %v670
    %v672 = vstv %s671
    %v673 = vmul.f32 %v672, %v619
    %674 = vst.msk [vmem:[%s9] sm:$0x3] %vm661, %v591
    %v675 = vmul.f32 %v620, 0.0001
    %v676 = vmul.f32 %v640, 0.1
    %v677 = vadd.f32 %v675, %v676
    %v678 = vadd.f32 %v677, %v673
    %vm679 = vcmask 0
    %680 = vst.msk [vmem:[#allocation8] sm:$0x1] %vm679, %v678
    // Predicated region
    $region46: #{tpu_custom_call.1} parent=1 // pred_check
      _
    $region47: #{tpu_custom_call.1} parent=1 // pred_check_branch
      %682 = sbr.rel (0) target = $region49
    $region48: #{tpu_custom_call.1} parent=1 // pred_region
      _
    $region49: #{tpu_custom_call.1} parent=1 // pred_fallthru
      _
    // Predicated region
    $region50: #{tpu_custom_call.1} parent=1 // pred_check
      _
    $region51: #{tpu_custom_call.1} parent=1 // pred_check_branch
      %684 = sbr.rel (0) target = $region53
    $region52: #{tpu_custom_call.1} parent=1 // pred_region
      %s686 = ssub.s32 16, 16
      %687 = vsyncadd [#allocation5], %s686
      %s689 = sshll.u32 [#allocation8], 4
      %s690 = int_to_ptr.vmem [resolvable:$true] %s689
      %692 = dma.vmem_to_hbm [thread:$0]  %s690, 16, %s10, [#allocation5]
    $region53: #{tpu_custom_call.1} parent=1 // pred_fallthru
      _
    // Predicated region
    $region54: #{tpu_custom_call.1} parent=1 // pred_check
      _
    $region55: #{tpu_custom_call.1} parent=1 // pred_check_branch
      %694 = sbr.rel (0) target = $region57
    $region56: #{tpu_custom_call.1} parent=1 // pred_region
      _
    $region57: #{tpu_custom_call.1} parent=1 // pred_fallthru
      _
    // Predicated region
    $region58: #{tpu_custom_call.1} parent=1 // pred_check
      _
    $region59: #{tpu_custom_call.1} parent=1 // pred_check_branch
      %696 = sbr.rel (0) target = $region61
    $region60: #{tpu_custom_call.1} parent=1 // pred_region
      %697 = dma.done [#allocation5], 16
    $region61: #{tpu_custom_call.1} parent=1 // pred_fallthru
      _
    %698 = vsyncpa [#allocation4], 1
    %699 = vsyncpa [#allocation7], 1
    %700 = vsyncpa [#allocation5], 1

</llo_original>
